<compile_context>
chip_gen: v5e
topology: v5e:2x2
jax: 0.10.0
libtpu: 0.0.40
codegen_flags: <defaults>
</compile_context>

<pallas_src>
import functools

import jax
import jax.numpy as jnp
import numpy as np
from jax.experimental import pallas as pl
from jax.experimental.pallas import tpu as pltpu


# ----------------------------------------------------------------------------------
# One-time, eager (import-time) probes — never executed under a jit trace.
# ----------------------------------------------------------------------------------
def _probe_roll_matches_numpy() -> bool:
    """True if pltpu.roll follows jnp.roll semantics (out[i] == x[(i - shift) % n])."""
    def _k(x_ref, o_ref):
        o_ref[...] = pltpu.roll(x_ref[...], shift=1, axis=1)

    x = jax.lax.broadcasted_iota(jnp.float32, (8, 128), 1)
    out = pl.pallas_call(_k, out_shape=jax.ShapeDtypeStruct((8, 128), jnp.float32))(x)
    return float(out[0, 0]) == 127.0


def _probe_inkernel_trig() -> bool:
    """True if Mosaic can lower jnp.sin / jnp.cos inside a kernel (EUP path)."""
    def _k(x_ref, o_ref):
        o_ref[...] = jnp.cos(x_ref[...]) + jnp.sin(x_ref[...])

    try:
        x = jnp.zeros((8, 128), jnp.float32)
        out = pl.pallas_call(_k, out_shape=jax.ShapeDtypeStruct((8, 128), jnp.float32))(x)
        return abs(float(jax.block_until_ready(out)[0, 0]) - 1.0) < 1e-3
    except Exception:
        return False


_ROLL_MATCHES_NUMPY = _probe_roll_matches_numpy()
_HAS_INKERNEL_TRIG = _probe_inkernel_trig()


# ----------------------------------------------------------------------------------
# Kernels
# ----------------------------------------------------------------------------------
def _rope_kernel_trig(x_ref, w_ref, b_ref, inv_ref, sign_ref, out_ref, *,
                      seq_tile, shift_src_plus, shift_src_minus):
    """Fused Q|K projection + RoPE; cos/sin generated in-kernel on the EUP."""
    # bf16 operands on the MXU, f32 accumulate.
    x = x_ref[0].astype(jnp.bfloat16)                                       # (ts, H)
    proj = jnp.dot(x, w_ref[...], preferred_element_type=jnp.float32) + b_ref[...]

    ts, wp = proj.shape
    # Positions of this sequence tile (sequence axis is the OUTER grid axis).
    base = (pl.program_id(0) * seq_tile).astype(jnp.float32)
    pos = base + jax.lax.broadcasted_iota(jnp.int32, (ts, wp), 0).astype(jnp.float32)
    angle = pos * inv_ref[...]                                              # (ts, wp)
    cos = jnp.cos(angle)
    sin_signed = jnp.sin(angle) * sign_ref[...]                             # -sin | +sin | 0(pad)

    # rotate_half in the flat layout: two XLU rolls + per-lane select on the sign vector.
    rot_plus = pltpu.roll(proj, shift=shift_src_plus, axis=1)               # source lane i + half
    rot_minus = pltpu.roll(proj, shift=shift_src_minus, axis=1)             # source lane i - half
    rot = jnp.where(sign_ref[...] < 0.0, rot_plus, rot_minus)

    # Lane-dense padded store; fp16 cast + pad-drop happen (fused) in the wrapper.
    out_ref[0] = (proj * cos + rot * sin_signed).astype(jnp.bfloat16)


def _rope_kernel_tables(x_ref, w_ref, b_ref, cos_ref, sin_ref, sign_ref, out_ref, *,
                        shift_src_plus, shift_src_minus):
    """Fallback: same math with precomputed bf16 cos / merged signed-sin tables."""
    x = x_ref[0].astype(jnp.bfloat16)                                       # (ts, H)
    proj = jnp.dot(x, w_ref[...], preferred_element_type=jnp.float32) + b_ref[...]

    cos = cos_ref[...].astype(jnp.float32)                                  # (ts, wp)
    sin_signed = sin_ref[...].astype(jnp.float32)

    rot_plus = pltpu.roll(proj, shift=shift_src_plus, axis=1)
    rot_minus = pltpu.roll(proj, shift=shift_src_minus, axis=1)
    rot = jnp.where(sign_ref[...] < 0.0, rot_plus, rot_minus)

    out_ref[0] = (proj * cos + rot * sin_signed).astype(jnp.bfloat16)


# ----------------------------------------------------------------------------------
# Wrapper
# ----------------------------------------------------------------------------------
def _pick_seq_tile(seq_len: int) -> int:
    """Largest sequence tile <= 512 that divides S and keeps the sublane dim aligned."""
    if seq_len <= 512:
        return seq_len                          # whole (small) sequence in one tile
    for ts in range(512, 7, -1):
        if seq_len % ts == 0 and ts % 8 == 0:
            return ts
    # TODO(synk): add remainder-tile handling for very large S with no sublane-aligned divisor.
    return seq_len


def _vmem_limit_bytes() -> int:
    try:
        cap = pltpu.get_tpu_info().vmem_capacity_bytes   # 128 MiB v5e/v6e, 64 MiB/TC v7x
        return int(max(32 << 20, min(96 << 20, (3 * cap) // 4)))
    except Exception:
        return 64 << 20


def rope_model_forward(x, wq, bq, wk, bk, *, num_heads, num_kv_heads, head_dim,
                       rope_theta=10000.0):
    """x: (B, S, hidden) f32; wq: (hidden, Hq*D); wk: (hidden, Hk*D); biases (1, N).
    Returns (B, S, (Hq+Hk)*D) f16 — identical to the PyTorch module's flattened output."""
    B, S, H = x.shape
    out_dim = (num_heads + num_kv_heads) * head_dim
    n_heads_total = num_heads + num_kv_heads
    half = head_dim // 2

    w_pad = ((out_dim + 127) // 128) * 128
    pad = w_pad - out_dim

    # ---- fused, lane-padded Q|K projection weight (bf16) & bias (f32): one MXU pass ----
    w_all = jnp.concatenate([wq, wk], axis=1)                               # (H, out_dim)
    b_all = jnp.concatenate([bq, bk], axis=1)                               # (1, out_dim)
    if pad:
        w_all = jnp.pad(w_all, ((0, 0), (0, pad)))
        b_all = jnp.pad(b_all, ((0, 0), (0, pad)))
    w_all = w_all.astype(jnp.bfloat16)
    b_all = b_all.astype(jnp.float32)

    # ---- tiny per-lane constants (numpy -> baked jit constants, never rebuilt per call) --
    inv_freq = 1.0 / rope_theta ** (np.arange(0, head_dim, 2, dtype=np.float32) / head_dim)
    inv_head = np.concatenate([inv_freq, inv_freq]).astype(np.float32)      # (D,)
    sign_head = np.concatenate(
        [-np.ones(half, np.float32), np.ones(half, np.float32)])            # (D,)
    inv_flat = np.zeros((1, w_pad), np.float32)
    sign_flat = np.zeros((1, w_pad), np.float32)
    inv_flat[0, :out_dim] = np.tile(inv_head, n_heads_total)
    sign_flat[0, :out_dim] = np.tile(sign_head, n_heads_total)
    inv_flat = jnp.asarray(inv_flat)
    sign_flat = jnp.asarray(sign_flat)

    # ---- roll shift amounts, convention resolved once at import ------------------------
    if _ROLL_MATCHES_NUMPY:
        shift_src_plus, shift_src_minus = w_pad - half, half
    else:
        shift_src_plus, shift_src_minus = half, w_pad - half

    # ---- grid: sequence tiles OUTER, batch INNER (residency), both parallel ------------
    ts = _pick_seq_tile(S)
    grid = (S // ts, B)

    x_spec = pl.BlockSpec((1, ts, H), lambda s, b: (b, s, 0))
    w_spec = pl.BlockSpec((H, w_pad), lambda s, b: (0, 0))                  # VMEM-resident
    vec_spec = pl.BlockSpec((1, w_pad), lambda s, b: (0, 0))                # VMEM-resident

    if _HAS_INKERNEL_TRIG:
        kernel = functools.partial(
            _rope_kernel_trig, seq_tile=ts,
            shift_src_plus=shift_src_plus, shift_src_minus=shift_src_minus)
        in_specs = [x_spec, w_spec, vec_spec, vec_spec, vec_spec]
        operands = (x, w_all, b_all, inv_flat, sign_flat)
    else:
        # Fallback: one bf16 cos table + one merged bf16 signed-sin table,
        # indexed only by the sequence tile (constant across the inner batch loop).
        positions = np.arange(S, dtype=np.float32)[:, None]                 # (S, 1)
        ang = positions * inv_head[None, :]                                 # (S, D)
        cos_full = np.zeros((S, w_pad), np.float32)
        sin_full = np.zeros((S, w_pad), np.float32)
        cos_full[:, :out_dim] = np.tile(np.cos(ang), (1, n_heads_total))
        sin_full[:, :out_dim] = np.tile(np.sin(ang) * sign_head[None, :], (1, n_heads_total))
        cos_tbl = jnp.asarray(cos_full).astype(jnp.bfloat16)
        sin_tbl = jnp.asarray(sin_full).astype(jnp.bfloat16)
        tbl_spec = pl.BlockSpec((ts, w_pad), lambda s, b: (s, 0))
        kernel = functools.partial(
            _rope_kernel_tables,
            shift_src_plus=shift_src_plus, shift_src_minus=shift_src_minus)
        in_specs = [x_spec, w_spec, vec_spec, tbl_spec, tbl_spec, vec_spec]
        operands = (x, w_all, b_all, cos_tbl, sin_tbl, sign_flat)

    out_padded = pl.pallas_call(
        kernel,
        out_shape=jax.ShapeDtypeStruct((B, S, w_pad), jnp.bfloat16),
        grid_spec=pltpu.PrefetchScalarGridSpec(
            num_scalar_prefetch=0,
            grid=grid,
            in_specs=in_specs,
            out_specs=pl.BlockSpec((1, ts, w_pad), lambda s, b: (b, s, 0)),
        ),
        compiler_params=pltpu.CompilerParams(
            dimension_semantics=("parallel", "parallel"),
            vmem_limit_bytes=_vmem_limit_bytes()),
    )(*operands)

    # Fuse padding-lane drop with the module's final fp16 cast (single XLA pass); keeps
    # the kernel store lane-dense and avoids relying on f16 support inside Mosaic.
    out = out_padded[..., :out_dim] if pad else out_padded
    return out.astype(jnp.float16)


# ----------------------------------------------------------------------------------
# Pure-JAX f32 reference mirroring the PyTorch forward (explicit / match / BNSD).
# ----------------------------------------------------------------------------------
def _reference(x, wq, bq, wk, bk, *, num_heads, num_kv_heads, head_dim,
               rope_theta=10000.0):
    B, S, H = x.shape
    inv_freq = 1.0 / rope_theta ** (
        jnp.arange(0, head_dim, 2, dtype=jnp.float32) / head_dim)
    freqs = jnp.arange(S, dtype=jnp.float32)[:, None] * inv_freq[None, :]
    emb = jnp.concatenate([freqs, freqs], axis=-1)
    cos, sin = jnp.cos(emb), jnp.sin(emb)

    q = (x @ wq + bq).reshape(B, S, num_heads, head_dim)
    k = (x @ wk + bk).reshape(B, S, num_kv_heads, head_dim)

    def rot_half(t):
        h = head_dim // 2
        return jnp.concatenate([-t[..., h:], t[..., :h]], axis=-1)

    c = cos[None, :, None, :]
    s_ = sin[None, :, None, :]
    q_out = (q * c + rot_half(q) * s_).reshape(B, S, -1)
    k_out = (k * c + rot_half(k) * s_).reshape(B, S, -1)
    return jnp.concatenate([q_out, k_out], axis=-1).astype(jnp.float16)


if __name__ == "__main__":
    # Small shapes consistent with the module: hidden=32, heads=4, kv_heads=2,
    # head_dim=8, batch=2, seq=8.
    hidden_size = 32
    num_heads = 4
    num_kv_heads = 2
    head_dim = hidden_size // num_heads
    B, S = 2, 8

    key = jax.random.PRNGKey(0)
    kx, kwq, kbq, kwk, kbk = jax.random.split(key, 5)

    x = jax.random.normal(kx, (B, S, hidden_size), dtype=jnp.float32)
    # nn.Linear-style init (deterministic): W stored pre-transposed (in, out).
    bound = 1.0 / np.sqrt(hidden_size)
    wq = jax.random.uniform(kwq, (hidden_size, num_heads * head_dim),
                            minval=-bound, maxval=bound, dtype=jnp.float32)
    bq = jax.random.uniform(kbq, (1, num_heads * head_dim),
                            minval=-bound, maxval=bound, dtype=jnp.float32)
    wk = jax.random.uniform(kwk, (hidden_size, num_kv_heads * head_dim),
                            minval=-bound, maxval=bound, dtype=jnp.float32)
    bk = jax.random.uniform(kbk, (1, num_kv_heads * head_dim),
                            minval=-bound, maxval=bound, dtype=jnp.float32)

    out = rope_model_forward(
        x, wq, bq, wk, bk,
        num_heads=num_heads, num_kv_heads=num_kv_heads, head_dim=head_dim)
    out = jax.block_until_ready(out)

    ref = _reference(
        x, wq, bq, wk, bk,
        num_heads=num_heads, num_kv_heads=num_kv_heads, head_dim=head_dim)

    assert out.shape == (B, S, (num_heads + num_kv_heads) * head_dim)
    assert out.dtype == jnp.float16
    # bf16 matmul operands / bf16 kernel store (fp16 final cast) => loose-ish tolerance.
    np.testing.assert_allclose(np.asarray(out, np.float32),
                               np.asarray(ref, np.float32),
                               rtol=2e-2, atol=2e-2)
    print("KERNEL_OK")
</pallas_src>

<mosaic_0001>
module attributes {stable_mosaic.version = 11 : i64} {
  func.func @_k(%arg0: memref<8x128xf32, #tpu.memory_space<vmem>>, %arg1: memref<8x128xf32, #tpu.memory_space<vmem>>) attributes {dimension_semantics = [], scalar_prefetch = 0 : i64, scratch_operands = 0 : i64, tpu.core_type = #tpu.core_type<tc>} {
    %c0 = arith.constant 0 : index
    %c0_0 = arith.constant 0 : index
    %0 = vector.load %arg0[%c0, %c0_0] : memref<8x128xf32, #tpu.memory_space<vmem>>, vector<8x128xf32>
    %c1_i32 = arith.constant 1 : i32
    %1 = tpu.dynamic_rotate %0 by %c1_i32 dim 1 : vector<8x128xf32>, i32 -> vector<8x128xf32>
    %c0_1 = arith.constant 0 : index
    %c0_2 = arith.constant 0 : index
    %2 = vector.load %arg1[%c0_1, %c0_2] : memref<8x128xf32, #tpu.memory_space<vmem>>, vector<8x128xf32>
    tpu.vector_store %arg1[%c0_1, %c0_2], %1 {strides = array<i32>} : memref<8x128xf32, #tpu.memory_space<vmem>>, vector<8x128xf32>,
    return
  }
}

</mosaic_0001>

<llo_original>
// kernel: tpu_custom_call.1
$region0: #{tpu_custom_call.1}
  #allocation0 [shape = 'u32[]', space=smem, size = 0x4, offset = 0x4, fixed_abs, tag = 'smem constant byte address 0x4 - core index']
  #allocation1 [shape = 'u32[72,128]{1,0:T(1,128)}', space=vmem, size = 0x9000, scoped, tag = 'internal scratch']
  %s0 = inlined_call_operand.hbm [shape: f32[8,128], index: 0, kind: input, shape index: {}]
  %s1 = inlined_call_operand.hbm [shape: f32[8,128], index: 1, kind: output, shape index: {}]
  %s2 = sld [smem:[#allocation0]]
  $region18: #{tpu_custom_call.1} parent=0
    _
  %s4 = ssub.s32 1, %s2
  %s5 = scalar_select 0, %s4, %s2
  $region1: #{tpu_custom_call.1} parent=0
    #allocation2 [shape = 'u8[4096]{0}', space=vmem, size = 0x1000, scoped, tag = 'input window, operand 0, single buffered']
    #allocation3 [shape = 's32[1]{0}', space=sflag, size = 0x4, scoped, tag = 'scoped memory for tpu_custom_call.1']
    #allocation4 [shape = 's32[1]{0}', space=sflag, size = 0x4, scoped, tag = 'scoped memory for tpu_custom_call.1']
    #allocation5 [shape = 'u8[4096]{0}', space=vmem, size = 0x1000, scoped, tag = 'output window, operand 0, single buffered']
    %6 = vsyncpa [#allocation3], 0
    %7 = vsyncpa [#allocation4], 0
    // Predicated region
    $region2: #{tpu_custom_call.1} parent=1 // pred_check
      _
    $region3: #{tpu_custom_call.1} parent=1 // pred_check_branch
      %9 = sbr.rel (0) target = $region5
    $region4: #{tpu_custom_call.1} parent=1 // pred_region
      %11 = vsyncadd [#allocation3], 0
      %s13 = sshll.u32 %s0, 4
      %s14 = int_to_ptr.hbm [resolvable:$true] %s13
      %s15 = sshll.u32 [#allocation2], 4
      %s16 = int_to_ptr.vmem [resolvable:$true] %s15
      %18 = dma.hbm_to_vmem [thread:$0]  %s14, 128, %s16, [#allocation3]
    $region5: #{tpu_custom_call.1} parent=1 // pred_fallthru
      _
    // Predicated region
    $region6: #{tpu_custom_call.1} parent=1 // pred_check
      _
    $region7: #{tpu_custom_call.1} parent=1 // pred_check_branch
      %20 = sbr.rel (0) target = $region9
    $region8: #{tpu_custom_call.1} parent=1 // pred_region
      %22 = dma.done [#allocation3], 128
    $region9: #{tpu_custom_call.1} parent=1 // pred_fallthru
      _
    %v23 = vld [vmem:[#allocation2] sm:$0xff]
    %24 = vrot.lane.b32.xlu0 %v23, 1
    %v25 = vpop.permute.xlu0 %24
    %26 = vst [vmem:[#allocation5] sm:$0xff] %v25
    // Predicated region
    $region10: #{tpu_custom_call.1} parent=1 // pred_check
      _
    $region11: #{tpu_custom_call.1} parent=1 // pred_check_branch
      %28 = sbr.rel (0) target = $region13
    $region12: #{tpu_custom_call.1} parent=1 // pred_region
      %30 = vsyncadd [#allocation4], 0
      %s32 = sshll.u32 [#allocation5], 4
      %s33 = int_to_ptr.vmem [resolvable:$true] %s32
      %s34 = sshll.u32 %s1, 4
      %s35 = int_to_ptr.hbm [resolvable:$true] %s34
      %37 = dma.vmem_to_hbm [thread:$0]  %s33, 128, %s35, [#allocation4]
    $region13: #{tpu_custom_call.1} parent=1 // pred_fallthru
      _
    // Predicated region
    $region14: #{tpu_custom_call.1} parent=1 // pred_check
      _
    $region15: #{tpu_custom_call.1} parent=1 // pred_check_branch
      %39 = sbr.rel (0) target = $region17
    $region16: #{tpu_custom_call.1} parent=1 // pred_region
      %41 = dma.done [#allocation4], 128
    $region17: #{tpu_custom_call.1} parent=1 // pred_fallthru
      _
    %42 = vsyncpa [#allocation3], 1
    %43 = vsyncpa [#allocation4], 1

</llo_original>
